<compile_context>
chip_gen: v5e
topology: v5e:2x2
jax: 0.10.0
libtpu: 0.0.40
codegen_flags: <defaults>
</compile_context>

<pallas_src>
import functools

import jax
import jax.numpy as jnp
from jax import lax
from jax.experimental import pallas as pl
from jax.experimental.pallas import tpu as pltpu

DROPOUT_P = 0.1


def _sdm_kernel(seed_ref, a_ref, v_ref, o_ref, *, dropout_p, apply_dropout):
    """softmax -> dropout -> matmul for a (Gb, S, S) x (Gb, S, D) block."""
    a = a_ref[...].astype(jnp.float32)          # (Gb, S, S); upcasts bf16 inputs too
    v = v_ref[...]                              # (Gb, S, D)
    gb, s, _ = a_ref.shape

    # numerically-stable softmax pieces; normalization folded post-matmul
    m = jnp.max(a, axis=-1, keepdims=True)
    e = jnp.exp(a - m)                          # values in (0, 1] -> safe bf16 range
    denom = jnp.sum(e, axis=-1, keepdims=True)  # (Gb, S, 1)

    scale = 1.0
    if apply_dropout:
        # Counter-based hash RNG (murmur3 finalizer) over the global element id.
        # Plain int32/uint32 VPU ops only: runs under interpret mode and on TPU.
        gi = lax.broadcasted_iota(jnp.int32, (gb, s, s), 0)
        qi = lax.broadcasted_iota(jnp.int32, (gb, s, s), 1)
        ki = lax.broadcasted_iota(jnp.int32, (gb, s, s), 2)
        lin = ((pl.program_id(0) * gb + gi) * s + qi) * s + ki   # global element id
        x = lin.astype(jnp.uint32) * jnp.uint32(0x9E3779B1)
        x = x + seed_ref[0].astype(jnp.uint32) * jnp.uint32(0x85EBCA77)
        x = x ^ (x >> 16)
        x = x * jnp.uint32(0x85EBCA6B)
        x = x ^ (x >> 13)
        x = x * jnp.uint32(0xC2B2AE35)
        x = x ^ (x >> 16)
        # integer compare on raw bits: keep with probability (1 - dropout_p)
        thresh = jnp.uint32(min(int(round(dropout_p * 2.0 ** 32)), 2 ** 32 - 1))
        e = jnp.where(x >= thresh, e, 0.0)
        scale = 1.0 / (1.0 - dropout_p)

    # bf16 MXU operands, f32 accumulate.
    acc = jnp.einsum("gqk,gkd->gqd",
                     e.astype(jnp.bfloat16), v.astype(jnp.bfloat16),
                     preferred_element_type=jnp.float32)
    # Fold softmax denominator + dropout scale into one per-row scale on the
    # small (Gb, S, D) result instead of the big (Gb, S, S) tile.
    o_ref[...] = (acc * (scale / denom)).astype(o_ref.dtype)


def _pick_heads_per_step(G, S, D, vmem_budget_bytes=24 * 1024 * 1024):
    """Largest divisor of G whose double-buffered blocks fit the VMEM budget,
    while keeping >= 2 grid steps so v7x's 2 TensorCores both get work."""
    bytes_per_head = 4 * (S * S + 2 * S * D)      # attn + value + out, f32
    best = 1
    for gb in range(1, G + 1):
        if G % gb:
            continue
        if 2 * gb * bytes_per_head > vmem_budget_bytes:   # x2: double buffering
            continue
        if G > 1 and G // gb < 2:
            continue
        best = gb
    return best


def softmax_dropout_matmul(attn, value, *, seed=0, dropout_p=DROPOUT_P,
                           training=True):
    """attn: [B,H,S,S], value: [B,H,S,D] -> [B,H,S,D] float32."""
    B, H, S, S2 = attn.shape
    assert S == S2
    Bv, Hv, Sv, D = value.shape
    assert (B, H, S) == (Bv, Hv, Sv)

    G = B * H
    Gb = _pick_heads_per_step(G, S, D)
    # TODO(synk): for S >~ 2048 the whole-row (Gb, S, S) attn block exceeds
    # v7x's default scoped VMEM; switch to a kv-chunked (flash-style) inner
    # loop over the last dim in that regime.
    # Note: output lane width D=64 (<128) means masked stores; acceptable here
    # since the output is small relative to the (S,S) softmax work.

    a = attn.reshape(G, S, S)
    v = value.reshape(G, S, D).astype(jnp.float32)
    seed_arr = jnp.asarray([seed], dtype=jnp.int32)

    kernel = functools.partial(
        _sdm_kernel,
        dropout_p=float(dropout_p),
        apply_dropout=bool(training) and float(dropout_p) > 0.0,
    )

    out = pl.pallas_call(
        kernel,
        out_shape=jax.ShapeDtypeStruct((G, S, D), jnp.float32),
        grid_spec=pltpu.PrefetchScalarGridSpec(
            num_scalar_prefetch=1,
            grid=(G // Gb,),
            in_specs=[
                pl.BlockSpec((Gb, S, S), lambda g, seed: (g, 0, 0)),
                pl.BlockSpec((Gb, S, D), lambda g, seed: (g, 0, 0)),
            ],
            out_specs=pl.BlockSpec((Gb, S, D), lambda g, seed: (g, 0, 0)),
        ),
        compiler_params=pltpu.CompilerParams(
            # each grid step is an independent group of heads -> shard across
            # TensorCores on v7x (harmless on v5e/v6e)
            dimension_semantics=("parallel",)),
    )(seed_arr, a, v)

    return out.reshape(B, H, S, D)


if __name__ == "__main__":
    # Small shapes consistent with the module's [1, 4, 384, 384] x [1, 4, 384, 64]
    B, H, S, D = 1, 4, 128, 64
    key = jax.random.PRNGKey(0)
    k1, k2 = jax.random.split(key)
    x178 = jax.random.normal(k1, (B, H, S, S), dtype=jnp.float32)  # attn logits
    x168 = jax.random.normal(k2, (B, H, S, D), dtype=jnp.float32)  # values

    # Eval-mode (no dropout) correctness check. Tolerance accounts for the
    # bf16 MXU operands (f32 accumulate).
    out_eval = softmax_dropout_matmul(x178, x168, training=False)
    jax.block_until_ready(out_eval)
    ref = jnp.einsum("bhqk,bhkd->bhqd", jax.nn.softmax(x178, axis=-1), x168)
    assert jnp.allclose(out_eval, ref, atol=2e-2, rtol=2e-2), "mismatch vs reference"

    # Training-mode forward (deterministic, hash-based inverted dropout).
    out_train = softmax_dropout_matmul(x178, x168, seed=0, training=True)
    jax.block_until_ready(out_train)
    assert out_train.shape == (B, H, S, D)
    assert bool(jnp.all(jnp.isfinite(out_train)))

    print("KERNEL_OK")
</pallas_src>

<mosaic_0001>
module attributes {stable_mosaic.version = 11 : i64} {
  func.func @_sdm_kernel(%arg0: i32, %arg1: memref<1xi32, #tpu.memory_space<smem>>, %arg2: memref<2x128x128xf32, #tpu.memory_space<vmem>>, %arg3: memref<2x128x64xf32, #tpu.memory_space<vmem>>, %arg4: memref<2x128x64xf32, #tpu.memory_space<vmem>>) attributes {dimension_semantics = [#tpu.dimension_semantics<parallel>], iteration_bounds = array<i64: 2>, scalar_prefetch = 1 : i64, scratch_operands = 0 : i64, tpu.core_type = #tpu.core_type<tc>, window_params = [{transform_indices = @transform_0, window_bounds = array<i64: 2, 128, 128>}, {transform_indices = @transform_1, window_bounds = array<i64: 2, 128, 64>}, {transform_indices = @transform_2, window_bounds = array<i64: 2, 128, 64>}]} {
    %c0 = arith.constant 0 : index
    %c0_0 = arith.constant 0 : index
    %c0_1 = arith.constant 0 : index
    %0 = vector.load %arg2[%c0, %c0_0, %c0_1] : memref<2x128x128xf32, #tpu.memory_space<vmem>>, vector<2x128x128xf32>
    %c0_2 = arith.constant 0 : index
    %c0_3 = arith.constant 0 : index
    %c0_4 = arith.constant 0 : index
    %1 = vector.load %arg3[%c0_2, %c0_3, %c0_4] : memref<2x128x64xf32, #tpu.memory_space<vmem>>, vector<2x128x64xf32>
    %cst = arith.constant dense<0xFF800000> : vector<2x128xf32>
    %2 = vector.multi_reduction <maximumf>, %0, %cst [2] : vector<2x128x128xf32> to vector<2x128xf32>
    %3 = vector.shape_cast %2 : vector<2x128xf32> to vector<2x128x1xf32>
    %4 = vector.broadcast %3 : vector<2x128x1xf32> to vector<2x128x128xf32>
    %5 = arith.subf %0, %4 : vector<2x128x128xf32>
    %6 = math.exp %5 : vector<2x128x128xf32>
    %cst_5 = arith.constant dense<0.000000e+00> : vector<2x128xf32>
    %7 = vector.multi_reduction <add>, %6, %cst_5 [2] : vector<2x128x128xf32> to vector<2x128xf32>
    %8 = vector.shape_cast %7 : vector<2x128xf32> to vector<2x128x1xf32>
    %9 = arith.truncf %6 : vector<2x128x128xf32> to vector<2x128x128xbf16>
    %10 = arith.truncf %1 : vector<2x128x64xf32> to vector<2x128x64xbf16>
    "tpu.trace_start"() <{level = 10 : i32, message = "gqk,gkd->gqd"}> : () -> ()
    %cst_6 = arith.constant dense<0.000000e+00> : vector<2x128x64xf32>
    %11 = tpu.matmul %9, %10, %cst_6 {dimension_numbers = #tpu.dot_dimension_numbers<[2], [1], [1], [2], [0, 0, 0, 1, 1, 2], [0], [0]>} : vector<2x128x128xbf16>, vector<2x128x64xbf16>, vector<2x128x64xf32> -> vector<2x128x64xf32>
    "tpu.trace_stop"() : () -> ()
    %cst_7 = arith.constant 1.000000e+00 : f32
    %12 = vector.broadcast %cst_7 : f32 to vector<2x128x1xf32>
    %13 = arith.divf %12, %8 : vector<2x128x1xf32>
    %14 = vector.broadcast %13 : vector<2x128x1xf32> to vector<2x128x64xf32>
    %15 = arith.mulf %11, %14 : vector<2x128x64xf32>
    %c0_8 = arith.constant 0 : index
    %c0_9 = arith.constant 0 : index
    %c0_10 = arith.constant 0 : index
    %16 = vector.load %arg4[%c0_8, %c0_9, %c0_10] : memref<2x128x64xf32, #tpu.memory_space<vmem>>, vector<2x128x64xf32>
    tpu.vector_store %arg4[%c0_8, %c0_9, %c0_10], %15 {strides = array<i32>} : memref<2x128x64xf32, #tpu.memory_space<vmem>>, vector<2x128x64xf32>,
    return
  }
  func.func @transform_0(%arg0: i32, %arg1: memref<1xi32, #tpu.memory_space<smem>>) -> (i32, i32, i32) {
    %c0_i32 = arith.constant 0 : i32
    %c0_i32_0 = arith.constant 0 : i32
    %c0_i32_1 = arith.constant 0 : i32
    return %arg0, %c0_i32, %c0_i32_0 : i32, i32, i32
  }
  func.func @transform_1(%arg0: i32, %arg1: memref<1xi32, #tpu.memory_space<smem>>) -> (i32, i32, i32) {
    %c0_i32 = arith.constant 0 : i32
    %c0_i32_0 = arith.constant 0 : i32
    %c0_i32_1 = arith.constant 0 : i32
    return %arg0, %c0_i32, %c0_i32_0 : i32, i32, i32
  }
  func.func @transform_2(%arg0: i32, %arg1: memref<1xi32, #tpu.memory_space<smem>>) -> (i32, i32, i32) {
    %c0_i32 = arith.constant 0 : i32
    %c0_i32_0 = arith.constant 0 : i32
    %c0_i32_1 = arith.constant 0 : i32
    return %arg0, %c0_i32, %c0_i32_0 : i32, i32, i32
  }
}

</mosaic_0001>

<llo_original>
// kernel: tpu_custom_call.1
$region0: #{tpu_custom_call.1}
  #allocation0 [shape = 'u32[]', space=smem, size = 0x4, offset = 0x4, fixed_abs, tag = 'smem constant byte address 0x4 - core index']
  #allocation1 [shape = 'u32[72,128]{1,0:T(1,128)}', space=vmem, size = 0x9000, scoped, tag = 'internal scratch']
  #allocation2 [shape = 's32[1]{0}', space=sflag, size = 0x4, scoped, tag = 'scoped memory for tpu_custom_call.1']
  #allocation3 [shape = 's32[1]{0:T(128)S(6)}', space=smem, size = 0x200, scoped, tag = 'prefetched SMEM operand 0']
  %s0 = inlined_call_operand.<no memory space> [shape: s32[1], index: 0, kind: input, shape index: {}]
  %s1 = inlined_call_operand.vmem [shape: f32[4,128,128], index: 1, kind: input, shape index: {}]
  %s2 = inlined_call_operand.vmem [shape: f32[4,128,64], index: 2, kind: input, shape index: {}]
  %s3 = inlined_call_operand.vmem [shape: f32[4,128,64], index: 3, kind: output, shape index: {}]
  %s4 = sld [smem:[#allocation0]]
  $region41: #{tpu_custom_call.1} parent=0
    _
  %s6 = ssub.s32 1, %s4
  %s7 = scalar_select 0, %s6, %s4
  %8 = sst [smem:[#allocation3]] %s0
  loop: start=0, step=1, limit=4
  $region2: #{tpu_custom_call.1} parent=0 // loop_pre_header
    _
  $region3: #{tpu_custom_call.1} parent=0 // loop_header
    %s10 = sphi 0, %s14
    %p11 = scmp.ge.s32.totalorder %s10, 4
    %s20 = sphi 0, %s22
    %s23 = sphi 0, %s20
    %s24 = sphi 0, %s23
    %s40 = sphi 0, %s24
    %s46 = sphi 0, %s48
    %s49 = sphi 0, %s46
    %s50 = sphi 0, %s49
    %s66 = sphi 0, %s50
    %s72 = sphi 0, %s74
    %s75 = sphi 0, %s72
    %s76 = sphi 0, %s75
    %s92 = sphi 0, %s76
  $region4: #{tpu_custom_call.1} parent=0 // loop_header_branch
    %13 = sbr.rel (%p11) target = $region8
  $region5: #{tpu_custom_call.1} parent=0 // loop_body
    %s15 = ssub.s32 %s10, 1
    %s16 = ssub.s32 %s10, 2
    %s17 = sadd.s32 %s10, 1
    %s18 = ssub.s32 %s10, %s17
    %p19 = scmp.eq.s32.totalorder %s18, 0
    %s21 = sadd.s32 %s20, 1
    %s22 = scalar_select %p19, %s20, %s21
    %p25 = pneg %p19
    %p26 = scmp.eq.s32.totalorder %s10, 1
    %p27 = por %p25, %p26
    %p28 = scmp.ne.s32.totalorder %s20, %s23
    %p29 = scmp.eq.s32.totalorder %s10, 0
    %p30 = por %p28, %p29
    %p31 = scmp.ne.s32.totalorder %s20, %s23
    %p32 = scmp.eq.s32.totalorder %s15, 1
    %p33 = por %p31, %p32
    %p34 = scmp.ne.s32.totalorder %s23, %s24
    %p35 = scmp.eq.s32.totalorder %s15, 0
    %p36 = por %p34, %p35
    %p37 = scmp.ne.s32.totalorder %s23, %s24
    %p38 = scmp.eq.s32.totalorder %s16, 1
    %p39 = por %p37, %p38
    %p41 = scmp.ne.s32.totalorder %s24, %s40
    %p42 = scmp.eq.s32.totalorder %s16, 0
    %p43 = por %p41, %p42
    %s44 = ssub.s32 %s10, %s17
    %p45 = scmp.eq.s32.totalorder %s44, 0
    %s47 = sadd.s32 %s46, 1
    %s48 = scalar_select %p45, %s46, %s47
    %p51 = pneg %p45
    %p52 = scmp.eq.s32.totalorder %s10, 1
    %p53 = por %p51, %p52
    %p54 = scmp.ne.s32.totalorder %s46, %s49
    %p55 = scmp.eq.s32.totalorder %s10, 0
    %p56 = por %p54, %p55
    %p57 = scmp.ne.s32.totalorder %s46, %s49
    %p58 = scmp.eq.s32.totalorder %s15, 1
    %p59 = por %p57, %p58
    %p60 = scmp.ne.s32.totalorder %s49, %s50
    %p61 = scmp.eq.s32.totalorder %s15, 0
    %p62 = por %p60, %p61
    %p63 = scmp.ne.s32.totalorder %s49, %s50
    %p64 = scmp.eq.s32.totalorder %s16, 1
    %p65 = por %p63, %p64
    %p67 = scmp.ne.s32.totalorder %s50, %s66
    %p68 = scmp.eq.s32.totalorder %s16, 0
    %p69 = por %p67, %p68
    %s70 = ssub.s32 %s10, %s17
    %p71 = scmp.eq.s32.totalorder %s70, 0
    %s73 = sadd.s32 %s72, 1
    %s74 = scalar_select %p71, %s72, %s73
    %p77 = pneg %p71
    %p78 = scmp.eq.s32.totalorder %s10, 1
    %p79 = por %p77, %p78
    %p80 = scmp.ne.s32.totalorder %s72, %s75
    %p81 = scmp.eq.s32.totalorder %s10, 0
    %p82 = por %p80, %p81
    %p83 = scmp.ne.s32.totalorder %s72, %s75
    %p84 = scmp.eq.s32.totalorder %s15, 1
    %p85 = por %p83, %p84
    %p86 = scmp.ne.s32.totalorder %s75, %s76
    %p87 = scmp.eq.s32.totalorder %s15, 0
    %p88 = por %p86, %p87
    %p89 = scmp.ne.s32.totalorder %s75, %s76
    %p90 = scmp.eq.s32.totalorder %s16, 1
    %p91 = por %p89, %p90
    %p93 = scmp.ne.s32.totalorder %s76, %s92
    %p94 = scmp.eq.s32.totalorder %s16, 0
    %p95 = por %p93, %p94
    %p96 = scmp.le.s32.totalorder 1, %s10
    %p97 = scmp.lt.s32.totalorder %s10, 3
    %p98 = pnand %p96, %p97
    %p99 = pneg %p98
    // Predicated region
    $region9: #{tpu_custom_call.1} parent=5 // pred_check
      _
    $region10: #{tpu_custom_call.1} parent=5 // pred_check_branch
      %101 = sbr.rel (%p98) target = $region12
    $region11: #{tpu_custom_call.1} parent=5 // pred_region
      %s102 = ssub.s32 %s10, 1
    $region12: #{tpu_custom_call.1} parent=5 // pred_fallthru
      _
    %p103 = scmp.lt.s32.totalorder %s10, 2
    // Predicated region
    $region13: #{tpu_custom_call.1} parent=5 // pred_check
      %p104 = pneg %p103
    $region14: #{tpu_custom_call.1} parent=5 // pred_check_branch
      %106 = sbr.rel (%p104) target = $region16
    $region15: #{tpu_custom_call.1} parent=5 // pred_region
      // Predicated region
      $region17: #{tpu_custom_call.1} parent=15 // pred_check
        %p107 = pneg %p30
      $region18: #{tpu_custom_call.1} parent=15 // pred_check_branch
        %109 = sbr.rel (%p107) target = $region20
      $region19: #{tpu_custom_call.1} parent=15 // pred_region
        %s110 = smul.u32 2, %s10
        %p111 = scmp.lt.s32.totalorder %s110, 3
        %s112 = scalar_select %p111, %s110, 3
        %s113 = smul.addr %s112, 16
        %s114 = smul.addr %s113, 8
        %s115 = scalar_lea.vmem %s1, %s114
        %s116 = smul.u32 2, %s10
      $region20: #{tpu_custom_call.1} parent=15 // pred_fallthru
        _
      // Predicated region
      $region21: #{tpu_custom_call.1} parent=15 // pred_check
        %p117 = pneg %p56
      $region22: #{tpu_custom_call.1} parent=15 // pred_check_branch
        %119 = sbr.rel (%p117) target = $region24
      $region23: #{tpu_custom_call.1} parent=15 // pred_region
        %s120 = smul.u32 2, %s10
        %p121 = scmp.lt.s32.totalorder %s120, 3
        %s122 = scalar_select %p121, %s120, 3
        %s123 = smul.addr %s122, 16
        %s124 = smul.addr %s123, 8
        %s125 = scalar_lea.vmem %s2, %s124
        %s126 = smul.u32 2, %s10
      $region24: #{tpu_custom_call.1} parent=15 // pred_fallthru
        _
    $region16: #{tpu_custom_call.1} parent=5 // pred_fallthru
      _
    %p127 = scmp.le.s32.totalorder 1, %s10
    %p128 = scmp.lt.s32.totalorder %s10, 3
    %p129 = pnand %p127, %p128
    %p130 = pneg %p129
    // Predicated region
    $region25: #{tpu_custom_call.1} parent=5 // pred_check
      _
    $region26: #{tpu_custom_call.1} parent=5 // pred_check_branch
      %132 = sbr.rel (%p129) target = $region28
    $region27: #{tpu_custom_call.1} parent=5 // pred_region
      %s133 = ssub.s32 %s10, 1
      %s134 = smul.u32 2, %s15
      %p135 = scmp.lt.s32.totalorder %s134, 3
      %s136 = scalar_select %p135, %s134, 3
      %s137 = smul.addr %s136, 16
      %s138 = smul.addr %s137, 8
      %s139 = scalar_lea.vmem %s1, %s138
      %p140 = pneg %p36
      %p141 = pneg %p33
      %s142 = smul.u32 2, %s15
      %p143 = scmp.lt.s32.totalorder %s142, 3
      %s144 = scalar_select %p143, %s142, 3
      %s145 = smul.addr %s144, 16
      %s146 = smul.addr %s145, 8
      %s147 = scalar_lea.vmem %s2, %s146
      %p148 = pneg %p62
      %p149 = pneg %p59
      %p150 = pneg %p88
      %p151 = pneg %p85
      %s152 = smul.u32 2, %s15
      %p153 = scmp.lt.s32.totalorder %s152, 3
      %s154 = scalar_select %p153, %s152, 3
      %s155 = smul.addr %s154, 16
      %s156 = smul.addr %s155, 8
      %s157 = scalar_lea.vmem %s3, %s156
      %s158 = smul.u32 2, %s15
      %p159 = scmp.lt.s32.totalorder %s158, 3
      %s160 = scalar_select %p159, %s158, 3
      %s161 = smul.addr %s160, 16
      %s162 = smul.addr %s161, 8
      %s163 = scalar_lea.vmem %s1, %s162
      %s164 = smul.u32 2, %s15
      %s165 = smul.u32 2, %s15
      %p166 = scmp.lt.s32.totalorder %s165, 3
      %s167 = scalar_select %p166, %s165, 3
      %s168 = smul.addr %s167, 16
      %s169 = smul.addr %s168, 8
      %s170 = scalar_lea.vmem %s2, %s169
      %s171 = smul.u32 2, %s15
      %s172 = smul.u32 2, %s15
      %p173 = scmp.lt.s32.totalorder %s172, 3
      %s174 = scalar_select %p173, %s172, 3
      %s175 = smul.addr %s174, 16
      %s176 = smul.addr %s175, 8
      %s177 = scalar_lea.vmem %s3, %s176
      %s178 = smul.u32 2, %s15
      %v179 = vld [vmem:[%s163] sm:$0xff]
      %v180 = vld [vmem:[%s163 + $0x8] sm:$0xff]
      %v181 = vld [vmem:[%s163 + $0x10] sm:$0xff]
      %v182 = vld [vmem:[%s163 + $0x18] sm:$0xff]
      %v183 = vld [vmem:[%s163 + $0x20] sm:$0xff]
      %v184 = vld [vmem:[%s163 + $0x28] sm:$0xff]
      %v185 = vld [vmem:[%s163 + $0x30] sm:$0xff]
      %v186 = vld [vmem:[%s163 + $0x38] sm:$0xff]
      %v187 = vld [vmem:[%s163 + $0x40] sm:$0xff]
      %v188 = vld [vmem:[%s163 + $0x48] sm:$0xff]
      %v189 = vld [vmem:[%s163 + $0x50] sm:$0xff]
      %v190 = vld [vmem:[%s163 + $0x58] sm:$0xff]
      %v191 = vld [vmem:[%s163 + $0x60] sm:$0xff]
      %v192 = vld [vmem:[%s163 + $0x68] sm:$0xff]
      %v193 = vld [vmem:[%s163 + $0x70] sm:$0xff]
      %v194 = vld [vmem:[%s163 + $0x78] sm:$0xff]
      %v195 = vld [vmem:[%s163 + $0x80] sm:$0xff]
      %v196 = vld [vmem:[%s163 + $0x88] sm:$0xff]
      %v197 = vld [vmem:[%s163 + $0x90] sm:$0xff]
      %v198 = vld [vmem:[%s163 + $0x98] sm:$0xff]
      %v199 = vld [vmem:[%s163 + $0xa0] sm:$0xff]
      %v200 = vld [vmem:[%s163 + $0xa8] sm:$0xff]
      %v201 = vld [vmem:[%s163 + $0xb0] sm:$0xff]
      %v202 = vld [vmem:[%s163 + $0xb8] sm:$0xff]
      %v203 = vld [vmem:[%s163 + $0xc0] sm:$0xff]
      %v204 = vld [vmem:[%s163 + $0xc8] sm:$0xff]
      %v205 = vld [vmem:[%s163 + $0xd0] sm:$0xff]
      %v206 = vld [vmem:[%s163 + $0xd8] sm:$0xff]
      %v207 = vld [vmem:[%s163 + $0xe0] sm:$0xff]
      %v208 = vld [vmem:[%s163 + $0xe8] sm:$0xff]
      %v209 = vld [vmem:[%s163 + $0xf0] sm:$0xff]
      %v210 = vld [vmem:[%s163 + $0xf8] sm:$0xff]
      %v211 = vld [vmem:[%s170] sm:$0xff]
      %v212 = vld [vmem:[%s170 + $0x8] sm:$0xff]
      %v213 = vld [vmem:[%s170 + $0x10] sm:$0xff]
      %v214 = vld [vmem:[%s170 + $0x18] sm:$0xff]
      %v215 = vld [vmem:[%s170 + $0x20] sm:$0xff]
      %v216 = vld [vmem:[%s170 + $0x28] sm:$0xff]
      %v217 = vld [vmem:[%s170 + $0x30] sm:$0xff]
      %v218 = vld [vmem:[%s170 + $0x38] sm:$0xff]
      %v219 = vld [vmem:[%s170 + $0x40] sm:$0xff]
      %v220 = vld [vmem:[%s170 + $0x48] sm:$0xff]
      %v221 = vld [vmem:[%s170 + $0x50] sm:$0xff]
      %v222 = vld [vmem:[%s170 + $0x58] sm:$0xff]
      %v223 = vld [vmem:[%s170 + $0x60] sm:$0xff]
      %v224 = vld [vmem:[%s170 + $0x68] sm:$0xff]
      %v225 = vld [vmem:[%s170 + $0x70] sm:$0xff]
      %v226 = vld [vmem:[%s170 + $0x78] sm:$0xff]
      %v227 = vld [vmem:[%s170 + $0x80] sm:$0xff]
      %v228 = vld [vmem:[%s170 + $0x88] sm:$0xff]
      %v229 = vld [vmem:[%s170 + $0x90] sm:$0xff]
      %v230 = vld [vmem:[%s170 + $0x98] sm:$0xff]
      %v231 = vld [vmem:[%s170 + $0xa0] sm:$0xff]
      %v232 = vld [vmem:[%s170 + $0xa8] sm:$0xff]
      %v233 = vld [vmem:[%s170 + $0xb0] sm:$0xff]
      %v234 = vld [vmem:[%s170 + $0xb8] sm:$0xff]
      %v235 = vld [vmem:[%s170 + $0xc0] sm:$0xff]
      %v236 = vld [vmem:[%s170 + $0xc8] sm:$0xff]
      %v237 = vld [vmem:[%s170 + $0xd0] sm:$0xff]
      %v238 = vld [vmem:[%s170 + $0xd8] sm:$0xff]
      %v239 = vld [vmem:[%s170 + $0xe0] sm:$0xff]
      %v240 = vld [vmem:[%s170 + $0xe8] sm:$0xff]
      %v241 = vld [vmem:[%s170 + $0xf0] sm:$0xff]
      %v242 = vld [vmem:[%s170 + $0xf8] sm:$0xff]
      %243 = vmax.xlane.f32.xlu0 %v179
      %v244 = vpop.xlane.xlu0 %243
      %245 = vmax.xlane.f32.xlu0 %v180
      %v246 = vpop.xlane.xlu0 %245
      %247 = vmax.xlane.f32.xlu0 %v181
      %v248 = vpop.xlane.xlu0 %247
      %249 = vmax.xlane.f32.xlu0 %v182
      %v250 = vpop.xlane.xlu0 %249
      %251 = vmax.xlane.f32.xlu0 %v183
      %v252 = vpop.xlane.xlu0 %251
      %253 = vmax.xlane.f32.xlu0 %v184
      %v254 = vpop.xlane.xlu0 %253
      %255 = vmax.xlane.f32.xlu0 %v185
      %v256 = vpop.xlane.xlu0 %255
      %257 = vmax.xlane.f32.xlu0 %v186
      %v258 = vpop.xlane.xlu0 %257
      %259 = vmax.xlane.f32.xlu0 %v187
      %v260 = vpop.xlane.xlu0 %259
      %261 = vmax.xlane.f32.xlu0 %v188
      %v262 = vpop.xlane.xlu0 %261
      %263 = vmax.xlane.f32.xlu0 %v189
      %v264 = vpop.xlane.xlu0 %263
      %265 = vmax.xlane.f32.xlu0 %v190
      %v266 = vpop.xlane.xlu0 %265
      %267 = vmax.xlane.f32.xlu0 %v191
      %v268 = vpop.xlane.xlu0 %267
      %269 = vmax.xlane.f32.xlu0 %v192
      %v270 = vpop.xlane.xlu0 %269
      %271 = vmax.xlane.f32.xlu0 %v193
      %v272 = vpop.xlane.xlu0 %271
      %273 = vmax.xlane.f32.xlu0 %v194
      %v274 = vpop.xlane.xlu0 %273
      %275 = vmax.xlane.f32.xlu0 %v195
      %v276 = vpop.xlane.xlu0 %275
      %277 = vmax.xlane.f32.xlu0 %v196
      %v278 = vpop.xlane.xlu0 %277
      %279 = vmax.xlane.f32.xlu0 %v197
      %v280 = vpop.xlane.xlu0 %279
      %281 = vmax.xlane.f32.xlu0 %v198
      %v282 = vpop.xlane.xlu0 %281
      %283 = vmax.xlane.f32.xlu0 %v199
      %v284 = vpop.xlane.xlu0 %283
      %285 = vmax.xlane.f32.xlu0 %v200
      %v286 = vpop.xlane.xlu0 %285
      %287 = vmax.xlane.f32.xlu0 %v201
      %v288 = vpop.xlane.xlu0 %287
      %289 = vmax.xlane.f32.xlu0 %v202
      %v290 = vpop.xlane.xlu0 %289
      %291 = vmax.xlane.f32.xlu0 %v203
      %v292 = vpop.xlane.xlu0 %291
      %293 = vmax.xlane.f32.xlu0 %v204
      %v294 = vpop.xlane.xlu0 %293
      %295 = vmax.xlane.f32.xlu0 %v205
      %v296 = vpop.xlane.xlu0 %295
      %297 = vmax.xlane.f32.xlu0 %v206
      %v298 = vpop.xlane.xlu0 %297
      %299 = vmax.xlane.f32.xlu0 %v207
      %v300 = vpop.xlane.xlu0 %299
      %301 = vmax.xlane.f32.xlu0 %v208
      %v302 = vpop.xlane.xlu0 %301
      %303 = vmax.xlane.f32.xlu0 %v209
      %v304 = vpop.xlane.xlu0 %303
      %305 = vmax.xlane.f32.xlu0 %v210
      %v306 = vpop.xlane.xlu0 %305
      %v307 = vsub.f32 %v179, %v244
      %v308 = vsub.f32 %v180, %v246
      %v309 = vsub.f32 %v181, %v248
      %v310 = vsub.f32 %v182, %v250
      %v311 = vsub.f32 %v183, %v252
      %v312 = vsub.f32 %v184, %v254
      %v313 = vsub.f32 %v185, %v256
      %v314 = vsub.f32 %v186, %v258
      %v315 = vsub.f32 %v187, %v260
      %v316 = vsub.f32 %v188, %v262
      %v317 = vsub.f32 %v189, %v264
      %v318 = vsub.f32 %v190, %v266
      %v319 = vsub.f32 %v191, %v268
      %v320 = vsub.f32 %v192, %v270
      %v321 = vsub.f32 %v193, %v272
      %v322 = vsub.f32 %v194, %v274
      %v323 = vsub.f32 %v195, %v276
      %v324 = vsub.f32 %v196, %v278
      %v325 = vsub.f32 %v197, %v280
      %v326 = vsub.f32 %v198, %v282
      %v327 = vsub.f32 %v199, %v284
      %v328 = vsub.f32 %v200, %v286
      %v329 = vsub.f32 %v201, %v288
      %v330 = vsub.f32 %v202, %v290
      %v331 = vsub.f32 %v203, %v292
      %v332 = vsub.f32 %v204, %v294
      %v333 = vsub.f32 %v205, %v296
      %v334 = vsub.f32 %v206, %v298
      %v335 = vsub.f32 %v207, %v300
      %v336 = vsub.f32 %v208, %v302
      %v337 = vsub.f32 %v209, %v304
      %v338 = vsub.f32 %v210, %v306
      %v339 = vmul.f32 %v307, 1.442695
      %v340 = vpow.pop %v339
      %v341 = vmul.f32 %v308, 1.442695
      %v342 = vpow.pop %v341
      %v343 = vmul.f32 %v309, 1.442695
      %v344 = vpow.pop %v343
      %v345 = vmul.f32 %v310, 1.442695
      %v346 = vpow.pop %v345
      %v347 = vmul.f32 %v311, 1.442695
      %v348 = vpow.pop %v347
      %v349 = vmul.f32 %v312, 1.442695
      %v350 = vpow.pop %v349
      %v351 = vmul.f32 %v313, 1.442695
      %v352 = vpow.pop %v351
      %v353 = vmul.f32 %v314, 1.442695
      %v354 = vpow.pop %v353
      %v355 = vmul.f32 %v315, 1.442695
      %v356 = vpow.pop %v355
      %v357 = vmul.f32 %v316, 1.442695
      %v358 = vpow.pop %v357
      %v359 = vmul.f32 %v317, 1.442695
      %v360 = vpow.pop %v359
      %v361 = vmul.f32 %v318, 1.442695
      %v362 = vpow.pop %v361
      %v363 = vmul.f32 %v319, 1.442695
      %v364 = vpow.pop %v363
      %v365 = vmul.f32 %v320, 1.442695
      %v366 = vpow.pop %v365
      %v367 = vmul.f32 %v321, 1.442695
      %v368 = vpow.pop %v367
      %v369 = vmul.f32 %v322, 1.442695
      %v370 = vpow.pop %v369
      %v371 = vmul.f32 %v323, 1.442695
      %v372 = vpow.pop %v371
      %v373 = vmul.f32 %v324, 1.442695
      %v374 = vpow.pop %v373
      %v375 = vmul.f32 %v325, 1.442695
      %v376 = vpow.pop %v375
      %v377 = vmul.f32 %v326, 1.442695
      %v378 = vpow.pop %v377
      %v379 = vmul.f32 %v327, 1.442695
      %v380 = vpow.pop %v379
      %v381 = vmul.f32 %v328, 1.442695
      %v382 = vpow.pop %v381
      %v383 = vmul.f32 %v329, 1.442695
      %v384 = vpow.pop %v383
      %v385 = vmul.f32 %v330, 1.442695
      %v386 = vpow.pop %v385
      %v387 = vmul.f32 %v331, 1.442695
      %v388 = vpow.pop %v387
      %v389 = vmul.f32 %v332, 1.442695
      %v390 = vpow.pop %v389
      %v391 = vmul.f32 %v333, 1.442695
      %v392 = vpow.pop %v391
      %v393 = vmul.f32 %v334, 1.442695
      %v394 = vpow.pop %v393
      %v395 = vmul.f32 %v335, 1.442695
      %v396 = vpow.pop %v395
      %v397 = vmul.f32 %v336, 1.442695
      %v398 = vpow.pop %v397
      %v399 = vmul.f32 %v337, 1.442695
      %v400 = vpow.pop %v399
      %v401 = vmul.f32 %v338, 1.442695
      %v402 = vpow.pop %v401
      %403 = vadd.xlane.f32.xlu0 %v340
      %v404 = vpop.xlane.xlu0 %403
      %405 = vadd.xlane.f32.xlu0 %v342
      %v406 = vpop.xlane.xlu0 %405
      %407 = vadd.xlane.f32.xlu0 %v344
      %v408 = vpop.xlane.xlu0 %407
      %409 = vadd.xlane.f32.xlu0 %v346
      %v410 = vpop.xlane.xlu0 %409
      %411 = vadd.xlane.f32.xlu0 %v348
      %v412 = vpop.xlane.xlu0 %411
      %413 = vadd.xlane.f32.xlu0 %v350
      %v414 = vpop.xlane.xlu0 %413
      %415 = vadd.xlane.f32.xlu0 %v352
      %v416 = vpop.xlane.xlu0 %415
      %417 = vadd.xlane.f32.xlu0 %v354
      %v418 = vpop.xlane.xlu0 %417
      %419 = vadd.xlane.f32.xlu0 %v356
      %v420 = vpop.xlane.xlu0 %419
      %421 = vadd.xlane.f32.xlu0 %v358
      %v422 = vpop.xlane.xlu0 %421
      %423 = vadd.xlane.f32.xlu0 %v360
      %v424 = vpop.xlane.xlu0 %423
      %425 = vadd.xlane.f32.xlu0 %v362
      %v426 = vpop.xlane.xlu0 %425
      %427 = vadd.xlane.f32.xlu0 %v364
      %v428 = vpop.xlane.xlu0 %427
      %429 = vadd.xlane.f32.xlu0 %v366
      %v430 = vpop.xlane.xlu0 %429
      %431 = vadd.xlane.f32.xlu0 %v368
      %v432 = vpop.xlane.xlu0 %431
      %433 = vadd.xlane.f32.xlu0 %v370
      %v434 = vpop.xlane.xlu0 %433
      %435 = vadd.xlane.f32.xlu0 %v372
      %v436 = vpop.xlane.xlu0 %435
      %437 = vadd.xlane.f32.xlu0 %v374
      %v438 = vpop.xlane.xlu0 %437
      %439 = vadd.xlane.f32.xlu0 %v376
      %v440 = vpop.xlane.xlu0 %439
      %441 = vadd.xlane.f32.xlu0 %v378
      %v442 = vpop.xlane.xlu0 %441
      %443 = vadd.xlane.f32.xlu0 %v380
      %v444 = vpop.xlane.xlu0 %443
      %445 = vadd.xlane.f32.xlu0 %v382
      %v446 = vpop.xlane.xlu0 %445
      %447 = vadd.xlane.f32.xlu0 %v384
      %v448 = vpop.xlane.xlu0 %447
      %449 = vadd.xlane.f32.xlu0 %v386
      %v450 = vpop.xlane.xlu0 %449
      %451 = vadd.xlane.f32.xlu0 %v388
      %v452 = vpop.xlane.xlu0 %451
      %453 = vadd.xlane.f32.xlu0 %v390
      %v454 = vpop.xlane.xlu0 %453
      %455 = vadd.xlane.f32.xlu0 %v392
      %v456 = vpop.xlane.xlu0 %455
      %457 = vadd.xlane.f32.xlu0 %v394
      %v458 = vpop.xlane.xlu0 %457
      %459 = vadd.xlane.f32.xlu0 %v396
      %v460 = vpop.xlane.xlu0 %459
      %461 = vadd.xlane.f32.xlu0 %v398
      %v462 = vpop.xlane.xlu0 %461
      %463 = vadd.xlane.f32.xlu0 %v400
      %v464 = vpop.xlane.xlu0 %463
      %465 = vadd.xlane.f32.xlu0 %v402
      %v466 = vpop.xlane.xlu0 %465
      %v467 = vpack.c.bf16 %v340, %v340
      %v468 = vpack.c.bf16 %v342, %v342
      %v469 = vpack.c.bf16 %v344, %v344
      %v470 = vpack.c.bf16 %v346, %v346
      %v471 = vpack.c.bf16 %v348, %v348
      %v472 = vpack.c.bf16 %v350, %v350
      %v473 = vpack.c.bf16 %v352, %v352
      %v474 = vpack.c.bf16 %v354, %v354
      %v475 = vpack.c.bf16 %v356, %v356
      %v476 = vpack.c.bf16 %v358, %v358
      %v477 = vpack.c.bf16 %v360, %v360
      %v478 = vpack.c.bf16 %v362, %v362
      %v479 = vpack.c.bf16 %v364, %v364
      %v480 = vpack.c.bf16 %v366, %v366
      %v481 = vpack.c.bf16 %v368, %v368
      %v482 = vpack.c.bf16 %v370, %v370
      %v483 = vpack.c.bf16 %v372, %v372
      %v484 = vpack.c.bf16 %v374, %v374
      %v485 = vpack.c.bf16 %v376, %v376
      %v486 = vpack.c.bf16 %v378, %v378
      %v487 = vpack.c.bf16 %v380, %v380
      %v488 = vpack.c.bf16 %v382, %v382
      %v489 = vpack.c.bf16 %v384, %v384
      %v490 = vpack.c.bf16 %v386, %v386
      %v491 = vpack.c.bf16 %v388, %v388
      %v492 = vpack.c.bf16 %v390, %v390
      %v493 = vpack.c.bf16 %v392, %v392
      %v494 = vpack.c.bf16 %v394, %v394
      %v495 = vpack.c.bf16 %v396, %v396
      %v496 = vpack.c.bf16 %v398, %v398
      %v497 = vpack.c.bf16 %v400, %v400
      %v498 = vpack.c.bf16 %v402, %v402
      %v499 = vpack.c.bf16 %v211, %v211
      %v500 = vpack.c.bf16 %v212, %v212
      %v501 = vpack.c.bf16 %v213, %v213
      %v502 = vpack.c.bf16 %v214, %v214
      %v503 = vpack.c.bf16 %v215, %v215
      %v504 = vpack.c.bf16 %v216, %v216
      %v505 = vpack.c.bf16 %v217, %v217
      %v506 = vpack.c.bf16 %v218, %v218
      %v507 = vpack.c.bf16 %v219, %v219
      %v508 = vpack.c.bf16 %v220, %v220
      %v509 = vpack.c.bf16 %v221, %v221
      %v510 = vpack.c.bf16 %v222, %v222
      %v511 = vpack.c.bf16 %v223, %v223
      %v512 = vpack.c.bf16 %v224, %v224
      %v513 = vpack.c.bf16 %v225, %v225
      %v514 = vpack.c.bf16 %v226, %v226
      %v515 = vpack.c.bf16 %v227, %v227
      %v516 = vpack.c.bf16 %v228, %v228
      %v517 = vpack.c.bf16 %v229, %v229
      %v518 = vpack.c.bf16 %v230, %v230
      %v519 = vpack.c.bf16 %v231, %v231
      %v520 = vpack.c.bf16 %v232, %v232
      %v521 = vpack.c.bf16 %v233, %v233
      %v522 = vpack.c.bf16 %v234, %v234
      %v523 = vpack.c.bf16 %v235, %v235
      %v524 = vpack.c.bf16 %v236, %v236
      %v525 = vpack.c.bf16 %v237, %v237
      %v526 = vpack.c.bf16 %v238, %v238
      %v527 = vpack.c.bf16 %v239, %v239
      %v528 = vpack.c.bf16 %v240, %v240
      %v529 = vpack.c.bf16 %v241, %v241
      %v530 = vpack.c.bf16 %v242, %v242
      %v547 = vunpack.c.l.b16 %v467
      %v548 = vunpack.c.l.b16 %v468
      %v549 = vunpack.c.l.b16 %v469
      %v550 = vunpack.c.l.b16 %v470
      %v551 = vunpack.c.l.b16 %v471
      %v552 = vunpack.c.l.b16 %v472
      %v553 = vunpack.c.l.b16 %v473
      %v554 = vunpack.c.l.b16 %v474
      %v555 = vunpack.c.l.b16 %v475
      %v556 = vunpack.c.l.b16 %v476
      %v557 = vunpack.c.l.b16 %v477
      %v558 = vunpack.c.l.b16 %v478
      %v559 = vunpack.c.l.b16 %v479
      %v560 = vunpack.c.l.b16 %v480
      %v561 = vunpack.c.l.b16 %v481
      %v562 = vunpack.c.l.b16 %v482
      %v563 = vpack.c.b16 %v548, %v547
      %v564 = vpack.c.b16 %v550, %v549
      %v565 = vpack.c.b16 %v552, %v551
      %v566 = vpack.c.b16 %v554, %v553
      %v567 = vpack.c.b16 %v556, %v555
      %v568 = vpack.c.b16 %v558, %v557
      %v569 = vpack.c.b16 %v560, %v559
      %v570 = vpack.c.b16 %v562, %v561
      %v595 = vunpack.c.l.b16 %v499
      %v596 = vunpack.c.l.b16 %v500
      %v597 = vunpack.c.l.b16 %v501
      %v598 = vunpack.c.l.b16 %v502
      %v599 = vunpack.c.l.b16 %v503
      %v600 = vunpack.c.l.b16 %v504
      %v601 = vunpack.c.l.b16 %v505
      %v602 = vunpack.c.l.b16 %v506
      %v603 = vunpack.c.l.b16 %v507
      %v604 = vunpack.c.l.b16 %v508
      %v605 = vunpack.c.l.b16 %v509
      %v606 = vunpack.c.l.b16 %v510
      %v607 = vunpack.c.l.b16 %v511
      %v608 = vunpack.c.l.b16 %v512
      %v609 = vunpack.c.l.b16 %v513
      %v610 = vunpack.c.l.b16 %v514
      %v611 = vpack.c.b16 %v596, %v595
      %v612 = vpack.c.b16 %v598, %v597
      %v613 = vpack.c.b16 %v600, %v599
      %v614 = vpack.c.b16 %v602, %v601
      %v615 = vpack.c.b16 %v604, %v603
      %v616 = vpack.c.b16 %v606, %v605
      %v617 = vpack.c.b16 %v608, %v607
      %v618 = vpack.c.b16 %v610, %v609
      %627 = vmatpush.bf16.msra.mxu0 %v618
      %628 = vmatpush.bf16.msra.mxu0 %v617
      %629 = vmatpush.bf16.msra.mxu0 %v616
      %630 = vmatpush.bf16.msra.mxu0 %v615
      %631 = vmatpush.bf16.msra.mxu0 %v614
      %632 = vmatpush.bf16.msra.mxu0 %v613
      %633 = vmatpush.bf16.msra.mxu0 %v612
      %634 = vmatpush.bf16.msra.mxu0 %v611
      %635 = vmatmul.bf16.gmra.mxu0 %v563
      %v636 = vpop.f32.mrf.mxu0
      %v637 = vadd.f32 0.0, %v636
      %v638 = vpop.f32.mrf.mxu0
      %v639 = vadd.f32 0.0, %v638
      %640 = vmatmul.bf16.gmra.mxu0 %v564
      %v641 = vpop.f32.mrf.mxu0
      %v642 = vadd.f32 0.0, %v641
      %v643 = vpop.f32.mrf.mxu0
      %v644 = vadd.f32 0.0, %v643
      %645 = vmatmul.bf16.gmra.mxu0 %v565
      %v646 = vpop.f32.mrf.mxu0
      %v647 = vadd.f32 0.0, %v646
      %v648 = vpop.f32.mrf.mxu0
      %v649 = vadd.f32 0.0, %v648
      %650 = vmatmul.bf16.gmra.mxu0 %v566
      %v651 = vpop.f32.mrf.mxu0
      %v652 = vadd.f32 0.0, %v651
      %v653 = vpop.f32.mrf.mxu0
      %v654 = vadd.f32 0.0, %v653
      %655 = vmatmul.bf16.gmra.mxu0 %v567
      %v656 = vpop.f32.mrf.mxu0
      %v657 = vadd.f32 0.0, %v656
      %v658 = vpop.f32.mrf.mxu0
      %v659 = vadd.f32 0.0, %v658
      %660 = vmatmul.bf16.gmra.mxu0 %v568
      %v661 = vpop.f32.mrf.mxu0
      %v662 = vadd.f32 0.0, %v661
      %v663 = vpop.f32.mrf.mxu0
      %v664 = vadd.f32 0.0, %v663
      %665 = vmatmul.bf16.gmra.mxu0 %v569
      %v666 = vpop.f32.mrf.mxu0
      %v667 = vadd.f32 0.0, %v666
      %v668 = vpop.f32.mrf.mxu0
      %v669 = vadd.f32 0.0, %v668
      %670 = vmatmul.bf16.gmra.mxu0 %v570
      %v671 = vpop.f32.mrf.mxu0
      %v672 = vadd.f32 0.0, %v671
      %v673 = vpop.f32.mrf.mxu0
      %v674 = vadd.f32 0.0, %v673
      %675 = vdwg.mxu0
      %v692 = vunpack.c.l.b16 %v483
      %v693 = vunpack.c.l.b16 %v484
      %v694 = vunpack.c.l.b16 %v485
      %v695 = vunpack.c.l.b16 %v486
      %v696 = vunpack.c.l.b16 %v487
      %v697 = vunpack.c.l.b16 %v488
      %v698 = vunpack.c.l.b16 %v489
      %v699 = vunpack.c.l.b16 %v490
      %v700 = vunpack.c.l.b16 %v491
      %v701 = vunpack.c.l.b16 %v492
      %v702 = vunpack.c.l.b16 %v493
      %v703 = vunpack.c.l.b16 %v494
      %v704 = vunpack.c.l.b16 %v495
      %v705 = vunpack.c.l.b16 %v496
      %v706 = vunpack.c.l.b16 %v497
      %v707 = vunpack.c.l.b16 %v498
      %v708 = vpack.c.b16 %v693, %v692
      %v709 = vpack.c.b16 %v695, %v694
      %v710 = vpack.c.b16 %v697, %v696
      %v711 = vpack.c.b16 %v699, %v698
      %v712 = vpack.c.b16 %v701, %v700
      %v713 = vpack.c.b16 %v703, %v702
      %v714 = vpack.c.b16 %v705, %v704
      %v715 = vpack.c.b16 %v707, %v706
      %v740 = vunpack.c.l.b16 %v515
      %v741 = vunpack.c.l.b16 %v516
      %v742 = vunpack.c.l.b16 %v517
      %v743 = vunpack.c.l.b16 %v518
      %v744 = vunpack.c.l.b16 %v519
      %v745 = vunpack.c.l.b16 %v520
      %v746 = vunpack.c.l.b16 %v521
      %v747 = vunpack.c.l.b16 %v522
      %v748 = vunpack.c.l.b16 %v523
      %v749 = vunpack.c.l.b16 %v524
      %v750 = vunpack.c.l.b16 %v525
      %v751 = vunpack.c.l.b16 %v526
      %v752 = vunpack.c.l.b16 %v527
      %v753 = vunpack.c.l.b16 %v528
      %v754 = vunpack.c.l.b16 %v529
      %v755 = vunpack.c.l.b16 %v530
      %v756 = vpack.c.b16 %v741, %v740
      %v757 = vpack.c.b16 %v743, %v742
      %v758 = vpack.c.b16 %v745, %v744
      %v759 = vpack.c.b16 %v747, %v746
      %v760 = vpack.c.b16 %v749, %v748
      %v761 = vpack.c.b16 %v751, %v750
      %v762 = vpack.c.b16 %v753, %v752
      %v763 = vpack.c.b16 %v755, %v754
      %772 = vmatpush.bf16.msra.mxu0 %v763
      %773 = vmatpush.bf16.msra.mxu0 %v762
      %774 = vmatpush.bf16.msra.mxu0 %v761
      %775 = vmatpush.bf16.msra.mxu0 %v760
      %776 = vmatpush.bf16.msra.mxu0 %v759
      %777 = vmatpush.bf16.msra.mxu0 %v758
      %778 = vmatpush.bf16.msra.mxu0 %v757
      %779 = vmatpush.bf16.msra.mxu0 %v756
      %780 = vmatmul.bf16.gmra.mxu0 %v708
      %v781 = vpop.f32.mrf.mxu0
      %v782 = vadd.f32 0.0, %v781
      %v783 = vpop.f32.mrf.mxu0
      %v784 = vadd.f32 0.0, %v783
      %785 = vmatmul.bf16.gmra.mxu0 %v709
      %v786 = vpop.f32.mrf.mxu0
      %v787 = vadd.f32 0.0, %v786
      %v788 = vpop.f32.mrf.mxu0
      %v789 = vadd.f32 0.0, %v788
      %790 = vmatmul.bf16.gmra.mxu0 %v710
      %v791 = vpop.f32.mrf.mxu0
      %v792 = vadd.f32 0.0, %v791
      %v793 = vpop.f32.mrf.mxu0
      %v794 = vadd.f32 0.0, %v793
      %795 = vmatmul.bf16.gmra.mxu0 %v711
      %v796 = vpop.f32.mrf.mxu0
      %v797 = vadd.f32 0.0, %v796
      %v798 = vpop.f32.mrf.mxu0
      %v799 = vadd.f32 0.0, %v798
      %800 = vmatmul.bf16.gmra.mxu0 %v712
      %v801 = vpop.f32.mrf.mxu0
      %v802 = vadd.f32 0.0, %v801
      %v803 = vpop.f32.mrf.mxu0
      %v804 = vadd.f32 0.0, %v803
      %805 = vmatmul.bf16.gmra.mxu0 %v713
      %v806 = vpop.f32.mrf.mxu0
      %v807 = vadd.f32 0.0, %v806
      %v808 = vpop.f32.mrf.mxu0
      %v809 = vadd.f32 0.0, %v808
      %810 = vmatmul.bf16.gmra.mxu0 %v714
      %v811 = vpop.f32.mrf.mxu0
      %v812 = vadd.f32 0.0, %v811
      %v813 = vpop.f32.mrf.mxu0
      %v814 = vadd.f32 0.0, %v813
      %815 = vmatmul.bf16.gmra.mxu0 %v715
      %v816 = vpop.f32.mrf.mxu0
      %v817 = vadd.f32 0.0, %v816
      %v818 = vpop.f32.mrf.mxu0
      %v819 = vadd.f32 0.0, %v818
      %820 = vdwg.mxu0
      %v821 = vrcp.pop %v404
      %v822 = vmul.f32 %v404, %v821
      %v823 = vsub.f32 1.0, %v822
      %v824 = vmul.f32 %v821, %v823
      %v825 = vadd.f32 %v821, %v824
      %vm826 = vweird.f32 %v404
      %vm827 = vweird.f32 %v821
      %vm828 = vmor %vm826, %vm827
      %v829 = vsel %vm828, %v821, %v825
      %v830 = vand.u32 2147483647, %v404
      %vm831 = vcmp.eq.f32.partialorder %v830, 8.507059e+37
      %v832 = vand.u32 %v404, 2147483648
      %v833 = vor.u32 1.1754944e-38, %v832
      %v834 = vsel %vm831, %v833, %v829
      %v835 = vmul.f32 1.0, %v834
      %v836 = vrcp.pop %v406
      %v837 = vmul.f32 %v406, %v836
      %v838 = vsub.f32 1.0, %v837
      %v839 = vmul.f32 %v836, %v838
      %v840 = vadd.f32 %v836, %v839
      %vm841 = vweird.f32 %v406
      %vm842 = vweird.f32 %v836
      %vm843 = vmor %vm841, %vm842
      %v844 = vsel %vm843, %v836, %v840
      %v845 = vand.u32 2147483647, %v406
      %vm846 = vcmp.eq.f32.partialorder %v845, 8.507059e+37
      %v847 = vand.u32 %v406, 2147483648
      %v848 = vor.u32 1.1754944e-38, %v847
      %v849 = vsel %vm846, %v848, %v844
      %v850 = vmul.f32 1.0, %v849
      %v851 = vrcp.pop %v408
      %v852 = vmul.f32 %v408, %v851
      %v853 = vsub.f32 1.0, %v852
      %v854 = vmul.f32 %v851, %v853
      %v855 = vadd.f32 %v851, %v854
      %vm856 = vweird.f32 %v408
      %vm857 = vweird.f32 %v851
      %vm858 = vmor %vm856, %vm857
      %v859 = vsel %vm858, %v851, %v855
      %v860 = vand.u32 2147483647, %v408
      %vm861 = vcmp.eq.f32.partialorder %v860, 8.507059e+37
      %v862 = vand.u32 %v408, 2147483648
      %v863 = vor.u32 1.1754944e-38, %v862
      %v864 = vsel %vm861, %v863, %v859
      %v865 = vmul.f32 1.0, %v864
      %v866 = vrcp.pop %v410
      %v867 = vmul.f32 %v410, %v866
      %v868 = vsub.f32 1.0, %v867
      %v869 = vmul.f32 %v866, %v868
      %v870 = vadd.f32 %v866, %v869
      %vm871 = vweird.f32 %v410
      %vm872 = vweird.f32 %v866
      %vm873 = vmor %vm871, %vm872
      %v874 = vsel %vm873, %v866, %v870
      %v875 = vand.u32 2147483647, %v410
      %vm876 = vcmp.eq.f32.partialorder %v875, 8.507059e+37
      %v877 = vand.u32 %v410, 2147483648
      %v878 = vor.u32 1.1754944e-38, %v877
      %v879 = vsel %vm876, %v878, %v874
      %v880 = vmul.f32 1.0, %v879
      %v881 = vrcp.pop %v412
      %v882 = vmul.f32 %v412, %v881
      %v883 = vsub.f32 1.0, %v882
      %v884 = vmul.f32 %v881, %v883
      %v885 = vadd.f32 %v881, %v884
      %vm886 = vweird.f32 %v412
      %vm887 = vweird.f32 %v881
      %vm888 = vmor %vm886, %vm887
      %v889 = vsel %vm888, %v881, %v885
      %v890 = vand.u32 2147483647, %v412
      %vm891 = vcmp.eq.f32.partialorder %v890, 8.507059e+37
      %v892 = vand.u32 %v412, 2147483648
      %v893 = vor.u32 1.1754944e-38, %v892
      %v894 = vsel %vm891, %v893, %v889
      %v895 = vmul.f32 1.0, %v894
      %v896 = vrcp.pop %v414
      %v897 = vmul.f32 %v414, %v896
      %v898 = vsub.f32 1.0, %v897
      %v899 = vmul.f32 %v896, %v898
      %v900 = vadd.f32 %v896, %v899
      %vm901 = vweird.f32 %v414
      %vm902 = vweird.f32 %v896
      %vm903 = vmor %vm901, %vm902
      %v904 = vsel %vm903, %v896, %v900
      %v905 = vand.u32 2147483647, %v414
      %vm906 = vcmp.eq.f32.partialorder %v905, 8.507059e+37
      %v907 = vand.u32 %v414, 2147483648
      %v908 = vor.u32 1.1754944e-38, %v907
      %v909 = vsel %vm906, %v908, %v904
      %v910 = vmul.f32 1.0, %v909
      %v911 = vrcp.pop %v416
      %v912 = vmul.f32 %v416, %v911
      %v913 = vsub.f32 1.0, %v912
      %v914 = vmul.f32 %v911, %v913
      %v915 = vadd.f32 %v911, %v914
      %vm916 = vweird.f32 %v416
      %vm917 = vweird.f32 %v911
      %vm918 = vmor %vm916, %vm917
      %v919 = vsel %vm918, %v911, %v915
      %v920 = vand.u32 2147483647, %v416
      %vm921 = vcmp.eq.f32.partialorder %v920, 8.507059e+37
      %v922 = vand.u32 %v416, 2147483648
      %v923 = vor.u32 1.1754944e-38, %v922
      %v924 = vsel %vm921, %v923, %v919
      %v925 = vmul.f32 1.0, %v924
      %v926 = vrcp.pop %v418
      %v927 = vmul.f32 %v418, %v926
      %v928 = vsub.f32 1.0, %v927
      %v929 = vmul.f32 %v926, %v928
      %v930 = vadd.f32 %v926, %v929
      %vm931 = vweird.f32 %v418
      %vm932 = vweird.f32 %v926
      %vm933 = vmor %vm931, %vm932
      %v934 = vsel %vm933, %v926, %v930
      %v935 = vand.u32 2147483647, %v418
      %vm936 = vcmp.eq.f32.partialorder %v935, 8.507059e+37
      %v937 = vand.u32 %v418, 2147483648
      %v938 = vor.u32 1.1754944e-38, %v937
      %v939 = vsel %vm936, %v938, %v934
      %v940 = vmul.f32 1.0, %v939
      %v941 = vrcp.pop %v420
      %v942 = vmul.f32 %v420, %v941
      %v943 = vsub.f32 1.0, %v942
      %v944 = vmul.f32 %v941, %v943
      %v945 = vadd.f32 %v941, %v944
      %vm946 = vweird.f32 %v420
      %vm947 = vweird.f32 %v941
      %vm948 = vmor %vm946, %vm947
      %v949 = vsel %vm948, %v941, %v945
      %v950 = vand.u32 2147483647, %v420
      %vm951 = vcmp.eq.f32.partialorder %v950, 8.507059e+37
      %v952 = vand.u32 %v420, 2147483648
      %v953 = vor.u32 1.1754944e-38, %v952
      %v954 = vsel %vm951, %v953, %v949
      %v955 = vmul.f32 1.0, %v954
      %v956 = vrcp.pop %v422
      %v957 = vmul.f32 %v422, %v956
      %v958 = vsub.f32 1.0, %v957
      %v959 = vmul.f32 %v956, %v958
      %v960 = vadd.f32 %v956, %v959
      %vm961 = vweird.f32 %v422
      %vm962 = vweird.f32 %v956
      %vm963 = vmor %vm961, %vm962
      %v964 = vsel %vm963, %v956, %v960
      %v965 = vand.u32 2147483647, %v422
      %vm966 = vcmp.eq.f32.partialorder %v965, 8.507059e+37
      %v967 = vand.u32 %v422, 2147483648
      %v968 = vor.u32 1.1754944e-38, %v967
      %v969 = vsel %vm966, %v968, %v964
      %v970 = vmul.f32 1.0, %v969
      %v971 = vrcp.pop %v424
      %v972 = vmul.f32 %v424, %v971
      %v973 = vsub.f32 1.0, %v972
      %v974 = vmul.f32 %v971, %v973
      %v975 = vadd.f32 %v971, %v974
      %vm976 = vweird.f32 %v424
      %vm977 = vweird.f32 %v971
      %vm978 = vmor %vm976, %vm977
      %v979 = vsel %vm978, %v971, %v975
      %v980 = vand.u32 2147483647, %v424
      %vm981 = vcmp.eq.f32.partialorder %v980, 8.507059e+37
      %v982 = vand.u32 %v424, 2147483648
      %v983 = vor.u32 1.1754944e-38, %v982
      %v984 = vsel %vm981, %v983, %v979
      %v985 = vmul.f32 1.0, %v984
      %v986 = vrcp.pop %v426
      %v987 = vmul.f32 %v426, %v986
      %v988 = vsub.f32 1.0, %v987
      %v989 = vmul.f32 %v986, %v988
      %v990 = vadd.f32 %v986, %v989
      %vm991 = vweird.f32 %v426
      %vm992 = vweird.f32 %v986
      %vm993 = vmor %vm991, %vm992
      %v994 = vsel %vm993, %v986, %v990
      %v995 = vand.u32 2147483647, %v426
      %vm996 = vcmp.eq.f32.partialorder %v995, 8.507059e+37
      %v997 = vand.u32 %v426, 2147483648
      %v998 = vor.u32 1.1754944e-38, %v997
      %v999 = vsel %vm996, %v998, %v994
      %v1000 = vmul.f32 1.0, %v999
      %v1001 = vrcp.pop %v428
      %v1002 = vmul.f32 %v428, %v1001
      %v1003 = vsub.f32 1.0, %v1002
      %v1004 = vmul.f32 %v1001, %v1003
      %v1005 = vadd.f32 %v1001, %v1004
      %vm1006 = vweird.f32 %v428
      %vm1007 = vweird.f32 %v1001
      %vm1008 = vmor %vm1006, %vm1007
      %v1009 = vsel %vm1008, %v1001, %v1005
      %v1010 = vand.u32 2147483647, %v428
      %vm1011 = vcmp.eq.f32.partialorder %v1010, 8.507059e+37
      %v1012 = vand.u32 %v428, 2147483648
      %v1013 = vor.u32 1.1754944e-38, %v1012
      %v1014 = vsel %vm1011, %v1013, %v1009
      %v1015 = vmul.f32 1.0, %v1014
      %v1016 = vrcp.pop %v430
      %v1017 = vmul.f32 %v430, %v1016
      %v1018 = vsub.f32 1.0, %v1017
      %v1019 = vmul.f32 %v1016, %v1018
      %v1020 = vadd.f32 %v1016, %v1019
      %vm1021 = vweird.f32 %v430
      %vm1022 = vweird.f32 %v1016
      %vm1023 = vmor %vm1021, %vm1022
      %v1024 = vsel %vm1023, %v1016, %v1020
      %v1025 = vand.u32 2147483647, %v430
      %vm1026 = vcmp.eq.f32.partialorder %v1025, 8.507059e+37
      %v1027 = vand.u32 %v430, 2147483648
      %v1028 = vor.u32 1.1754944e-38, %v1027
      %v1029 = vsel %vm1026, %v1028, %v1024
      %v1030 = vmul.f32 1.0, %v1029
      %v1031 = vrcp.pop %v432
      %v1032 = vmul.f32 %v432, %v1031
      %v1033 = vsub.f32 1.0, %v1032
      %v1034 = vmul.f32 %v1031, %v1033
      %v1035 = vadd.f32 %v1031, %v1034
      %vm1036 = vweird.f32 %v432
      %vm1037 = vweird.f32 %v1031
      %vm1038 = vmor %vm1036, %vm1037
      %v1039 = vsel %vm1038, %v1031, %v1035
      %v1040 = vand.u32 2147483647, %v432
      %vm1041 = vcmp.eq.f32.partialorder %v1040, 8.507059e+37
      %v1042 = vand.u32 %v432, 2147483648
      %v1043 = vor.u32 1.1754944e-38, %v1042
      %v1044 = vsel %vm1041, %v1043, %v1039
      %v1045 = vmul.f32 1.0, %v1044
      %v1046 = vrcp.pop %v434
      %v1047 = vmul.f32 %v434, %v1046
      %v1048 = vsub.f32 1.0, %v1047
      %v1049 = vmul.f32 %v1046, %v1048
      %v1050 = vadd.f32 %v1046, %v1049
      %vm1051 = vweird.f32 %v434
      %vm1052 = vweird.f32 %v1046
      %vm1053 = vmor %vm1051, %vm1052
      %v1054 = vsel %vm1053, %v1046, %v1050
      %v1055 = vand.u32 2147483647, %v434
      %vm1056 = vcmp.eq.f32.partialorder %v1055, 8.507059e+37
      %v1057 = vand.u32 %v434, 2147483648
      %v1058 = vor.u32 1.1754944e-38, %v1057
      %v1059 = vsel %vm1056, %v1058, %v1054
      %v1060 = vmul.f32 1.0, %v1059
      %v1061 = vrcp.pop %v436
      %v1062 = vmul.f32 %v436, %v1061
      %v1063 = vsub.f32 1.0, %v1062
      %v1064 = vmul.f32 %v1061, %v1063
      %v1065 = vadd.f32 %v1061, %v1064
      %vm1066 = vweird.f32 %v436
      %vm1067 = vweird.f32 %v1061
      %vm1068 = vmor %vm1066, %vm1067
      %v1069 = vsel %vm1068, %v1061, %v1065
      %v1070 = vand.u32 2147483647, %v436
      %vm1071 = vcmp.eq.f32.partialorder %v1070, 8.507059e+37
      %v1072 = vand.u32 %v436, 2147483648
      %v1073 = vor.u32 1.1754944e-38, %v1072
      %v1074 = vsel %vm1071, %v1073, %v1069
      %v1075 = vmul.f32 1.0, %v1074
      %v1076 = vrcp.pop %v438
      %v1077 = vmul.f32 %v438, %v1076
      %v1078 = vsub.f32 1.0, %v1077
      %v1079 = vmul.f32 %v1076, %v1078
      %v1080 = vadd.f32 %v1076, %v1079
      %vm1081 = vweird.f32 %v438
      %vm1082 = vweird.f32 %v1076
      %vm1083 = vmor %vm1081, %vm1082
      %v1084 = vsel %vm1083, %v1076, %v1080
      %v1085 = vand.u32 2147483647, %v438
      %vm1086 = vcmp.eq.f32.partialorder %v1085, 8.507059e+37
      %v1087 = vand.u32 %v438, 2147483648
      %v1088 = vor.u32 1.1754944e-38, %v1087
      %v1089 = vsel %vm1086, %v1088, %v1084
      %v1090 = vmul.f32 1.0, %v1089
      %v1091 = vrcp.pop %v440
      %v1092 = vmul.f32 %v440, %v1091
      %v1093 = vsub.f32 1.0, %v1092
      %v1094 = vmul.f32 %v1091, %v1093
      %v1095 = vadd.f32 %v1091, %v1094
      %vm1096 = vweird.f32 %v440
      %vm1097 = vweird.f32 %v1091
      %vm1098 = vmor %vm1096, %vm1097
      %v1099 = vsel %vm1098, %v1091, %v1095
      %v1100 = vand.u32 2147483647, %v440
      %vm1101 = vcmp.eq.f32.partialorder %v1100, 8.507059e+37
      %v1102 = vand.u32 %v440, 2147483648
      %v1103 = vor.u32 1.1754944e-38, %v1102
      %v1104 = vsel %vm1101, %v1103, %v1099
      %v1105 = vmul.f32 1.0, %v1104
      %v1106 = vrcp.pop %v442
      %v1107 = vmul.f32 %v442, %v1106
      %v1108 = vsub.f32 1.0, %v1107
      %v1109 = vmul.f32 %v1106, %v1108
      %v1110 = vadd.f32 %v1106, %v1109
      %vm1111 = vweird.f32 %v442
      %vm1112 = vweird.f32 %v1106
      %vm1113 = vmor %vm1111, %vm1112
      %v1114 = vsel %vm1113, %v1106, %v1110
      %v1115 = vand.u32 2147483647, %v442
      %vm1116 = vcmp.eq.f32.partialorder %v1115, 8.507059e+37
      %v1117 = vand.u32 %v442, 2147483648
      %v1118 = vor.u32 1.1754944e-38, %v1117
      %v1119 = vsel %vm1116, %v1118, %v1114
      %v1120 = vmul.f32 1.0, %v1119
      %v1121 = vrcp.pop %v444
      %v1122 = vmul.f32 %v444, %v1121
      %v1123 = vsub.f32 1.0, %v1122
      %v1124 = vmul.f32 %v1121, %v1123
      %v1125 = vadd.f32 %v1121, %v1124
      %vm1126 = vweird.f32 %v444
      %vm1127 = vweird.f32 %v1121
      %vm1128 = vmor %vm1126, %vm1127
      %v1129 = vsel %vm1128, %v1121, %v1125
      %v1130 = vand.u32 2147483647, %v444
      %vm1131 = vcmp.eq.f32.partialorder %v1130, 8.507059e+37
      %v1132 = vand.u32 %v444, 2147483648
      %v1133 = vor.u32 1.1754944e-38, %v1132
      %v1134 = vsel %vm1131, %v1133, %v1129
      %v1135 = vmul.f32 1.0, %v1134
      %v1136 = vrcp.pop %v446
      %v1137 = vmul.f32 %v446, %v1136
      %v1138 = vsub.f32 1.0, %v1137
      %v1139 = vmul.f32 %v1136, %v1138
      %v1140 = vadd.f32 %v1136, %v1139
      %vm1141 = vweird.f32 %v446
      %vm1142 = vweird.f32 %v1136
      %vm1143 = vmor %vm1141, %vm1142
      %v1144 = vsel %vm1143, %v1136, %v1140
      %v1145 = vand.u32 2147483647, %v446
      %vm1146 = vcmp.eq.f32.partialorder %v1145, 8.507059e+37
      %v1147 = vand.u32 %v446, 2147483648
      %v1148 = vor.u32 1.1754944e-38, %v1147
      %v1149 = vsel %vm1146, %v1148, %v1144
      %v1150 = vmul.f32 1.0, %v1149
      %v1151 = vrcp.pop %v448
      %v1152 = vmul.f32 %v448, %v1151
      %v1153 = vsub.f32 1.0, %v1152
      %v1154 = vmul.f32 %v1151, %v1153
      %v1155 = vadd.f32 %v1151, %v1154
      %vm1156 = vweird.f32 %v448
      %vm1157 = vweird.f32 %v1151
      %vm1158 = vmor %vm1156, %vm1157
      %v1159 = vsel %vm1158, %v1151, %v1155
      %v1160 = vand.u32 2147483647, %v448
      %vm1161 = vcmp.eq.f32.partialorder %v1160, 8.507059e+37
      %v1162 = vand.u32 %v448, 2147483648
      %v1163 = vor.u32 1.1754944e-38, %v1162
      %v1164 = vsel %vm1161, %v1163, %v1159
      %v1165 = vmul.f32 1.0, %v1164
      %v1166 = vrcp.pop %v450
      %v1167 = vmul.f32 %v450, %v1166
      %v1168 = vsub.f32 1.0, %v1167
      %v1169 = vmul.f32 %v1166, %v1168
      %v1170 = vadd.f32 %v1166, %v1169
      %vm1171 = vweird.f32 %v450
      %vm1172 = vweird.f32 %v1166
      %vm1173 = vmor %vm1171, %vm1172
      %v1174 = vsel %vm1173, %v1166, %v1170
      %v1175 = vand.u32 2147483647, %v450
      %vm1176 = vcmp.eq.f32.partialorder %v1175, 8.507059e+37
      %v1177 = vand.u32 %v450, 2147483648
      %v1178 = vor.u32 1.1754944e-38, %v1177
      %v1179 = vsel %vm1176, %v1178, %v1174
      %v1180 = vmul.f32 1.0, %v1179
      %v1181 = vrcp.pop %v452
      %v1182 = vmul.f32 %v452, %v1181
      %v1183 = vsub.f32 1.0, %v1182
      %v1184 = vmul.f32 %v1181, %v1183
      %v1185 = vadd.f32 %v1181, %v1184
      %vm1186 = vweird.f32 %v452
      %vm1187 = vweird.f32 %v1181
      %vm1188 = vmor %vm1186, %vm1187
      %v1189 = vsel %vm1188, %v1181, %v1185
      %v1190 = vand.u32 2147483647, %v452
      %vm1191 = vcmp.eq.f32.partialorder %v1190, 8.507059e+37
      %v1192 = vand.u32 %v452, 2147483648
      %v1193 = vor.u32 1.1754944e-38, %v1192
      %v1194 = vsel %vm1191, %v1193, %v1189
      %v1195 = vmul.f32 1.0, %v1194
      %v1196 = vrcp.pop %v454
      %v1197 = vmul.f32 %v454, %v1196
      %v1198 = vsub.f32 1.0, %v1197
      %v1199 = vmul.f32 %v1196, %v1198
      %v1200 = vadd.f32 %v1196, %v1199
      %vm1201 = vweird.f32 %v454
      %vm1202 = vweird.f32 %v1196
      %vm1203 = vmor %vm1201, %vm1202
      %v1204 = vsel %vm1203, %v1196, %v1200
      %v1205 = vand.u32 2147483647, %v454
      %vm1206 = vcmp.eq.f32.partialorder %v1205, 8.507059e+37
      %v1207 = vand.u32 %v454, 2147483648
      %v1208 = vor.u32 1.1754944e-38, %v1207
      %v1209 = vsel %vm1206, %v1208, %v1204
      %v1210 = vmul.f32 1.0, %v1209
      %v1211 = vrcp.pop %v456
      %v1212 = vmul.f32 %v456, %v1211
      %v1213 = vsub.f32 1.0, %v1212
      %v1214 = vmul.f32 %v1211, %v1213
      %v1215 = vadd.f32 %v1211, %v1214
      %vm1216 = vweird.f32 %v456
      %vm1217 = vweird.f32 %v1211
      %vm1218 = vmor %vm1216, %vm1217
      %v1219 = vsel %vm1218, %v1211, %v1215
      %v1220 = vand.u32 2147483647, %v456
      %vm1221 = vcmp.eq.f32.partialorder %v1220, 8.507059e+37
      %v1222 = vand.u32 %v456, 2147483648
      %v1223 = vor.u32 1.1754944e-38, %v1222
      %v1224 = vsel %vm1221, %v1223, %v1219
      %v1225 = vmul.f32 1.0, %v1224
      %v1226 = vrcp.pop %v458
      %v1227 = vmul.f32 %v458, %v1226
      %v1228 = vsub.f32 1.0, %v1227
      %v1229 = vmul.f32 %v1226, %v1228
      %v1230 = vadd.f32 %v1226, %v1229
      %vm1231 = vweird.f32 %v458
      %vm1232 = vweird.f32 %v1226
      %vm1233 = vmor %vm1231, %vm1232
      %v1234 = vsel %vm1233, %v1226, %v1230
      %v1235 = vand.u32 2147483647, %v458
      %vm1236 = vcmp.eq.f32.partialorder %v1235, 8.507059e+37
      %v1237 = vand.u32 %v458, 2147483648
      %v1238 = vor.u32 1.1754944e-38, %v1237
      %v1239 = vsel %vm1236, %v1238, %v1234
      %v1240 = vmul.f32 1.0, %v1239
      %v1241 = vrcp.pop %v460
      %v1242 = vmul.f32 %v460, %v1241
      %v1243 = vsub.f32 1.0, %v1242
      %v1244 = vmul.f32 %v1241, %v1243
      %v1245 = vadd.f32 %v1241, %v1244
      %vm1246 = vweird.f32 %v460
      %vm1247 = vweird.f32 %v1241
      %vm1248 = vmor %vm1246, %vm1247
      %v1249 = vsel %vm1248, %v1241, %v1245
      %v1250 = vand.u32 2147483647, %v460
      %vm1251 = vcmp.eq.f32.partialorder %v1250, 8.507059e+37
      %v1252 = vand.u32 %v460, 2147483648
      %v1253 = vor.u32 1.1754944e-38, %v1252
      %v1254 = vsel %vm1251, %v1253, %v1249
      %v1255 = vmul.f32 1.0, %v1254
      %v1256 = vrcp.pop %v462
      %v1257 = vmul.f32 %v462, %v1256
      %v1258 = vsub.f32 1.0, %v1257
      %v1259 = vmul.f32 %v1256, %v1258
      %v1260 = vadd.f32 %v1256, %v1259
      %vm1261 = vweird.f32 %v462
      %vm1262 = vweird.f32 %v1256
      %vm1263 = vmor %vm1261, %vm1262
      %v1264 = vsel %vm1263, %v1256, %v1260
      %v1265 = vand.u32 2147483647, %v462
      %vm1266 = vcmp.eq.f32.partialorder %v1265, 8.507059e+37
      %v1267 = vand.u32 %v462, 2147483648
      %v1268 = vor.u32 1.1754944e-38, %v1267
      %v1269 = vsel %vm1266, %v1268, %v1264
      %v1270 = vmul.f32 1.0, %v1269
      %v1271 = vrcp.pop %v464
      %v1272 = vmul.f32 %v464, %v1271
      %v1273 = vsub.f32 1.0, %v1272
      %v1274 = vmul.f32 %v1271, %v1273
      %v1275 = vadd.f32 %v1271, %v1274
      %vm1276 = vweird.f32 %v464
      %vm1277 = vweird.f32 %v1271
      %vm1278 = vmor %vm1276, %vm1277
      %v1279 = vsel %vm1278, %v1271, %v1275
      %v1280 = vand.u32 2147483647, %v464
      %vm1281 = vcmp.eq.f32.partialorder %v1280, 8.507059e+37
      %v1282 = vand.u32 %v464, 2147483648
      %v1283 = vor.u32 1.1754944e-38, %v1282
      %v1284 = vsel %vm1281, %v1283, %v1279
      %v1285 = vmul.f32 1.0, %v1284
      %v1286 = vrcp.pop %v466
      %v1287 = vmul.f32 %v466, %v1286
      %v1288 = vsub.f32 1.0, %v1287
      %v1289 = vmul.f32 %v1286, %v1288
      %v1290 = vadd.f32 %v1286, %v1289
      %vm1291 = vweird.f32 %v466
      %vm1292 = vweird.f32 %v1286
      %vm1293 = vmor %vm1291, %vm1292
      %v1294 = vsel %vm1293, %v1286, %v1290
      %v1295 = vand.u32 2147483647, %v466
      %vm1296 = vcmp.eq.f32.partialorder %v1295, 8.507059e+37
      %v1297 = vand.u32 %v466, 2147483648
      %v1298 = vor.u32 1.1754944e-38, %v1297
      %v1299 = vsel %vm1296, %v1298, %v1294
      %v1300 = vmul.f32 1.0, %v1299
      %v1301 = vmul.f32 %v637, %v835
      %v1302 = vmul.f32 %v639, %v850
      %v1303 = vmul.f32 %v642, %v865
      %v1304 = vmul.f32 %v644, %v880
      %v1305 = vmul.f32 %v647, %v895
      %v1306 = vmul.f32 %v649, %v910
      %v1307 = vmul.f32 %v652, %v925
      %v1308 = vmul.f32 %v654, %v940
      %v1309 = vmul.f32 %v657, %v955
      %v1310 = vmul.f32 %v659, %v970
      %v1311 = vmul.f32 %v662, %v985
      %v1312 = vmul.f32 %v664, %v1000
      %v1313 = vmul.f32 %v667, %v1015
      %v1314 = vmul.f32 %v669, %v1030
      %v1315 = vmul.f32 %v672, %v1045
      %v1316 = vmul.f32 %v674, %v1060
      %v1317 = vmul.f32 %v782, %v1075
      %v1318 = vmul.f32 %v784, %v1090
      %v1319 = vmul.f32 %v787, %v1105
      %v1320 = vmul.f32 %v789, %v1120
      %v1321 = vmul.f32 %v792, %v1135
      %v1322 = vmul.f32 %v794, %v1150
      %v1323 = vmul.f32 %v797, %v1165
      %v1324 = vmul.f32 %v799, %v1180
      %v1325 = vmul.f32 %v802, %v1195
      %v1326 = vmul.f32 %v804, %v1210
      %v1327 = vmul.f32 %v807, %v1225
      %v1328 = vmul.f32 %v809, %v1240
      %v1329 = vmul.f32 %v812, %v1255
      %v1330 = vmul.f32 %v814, %v1270
      %v1331 = vmul.f32 %v817, %v1285
      %v1332 = vmul.f32 %v819, %v1300
      %vm1333 = vcmask 523264
      %1334 = vst.msk [vmem:[%s177] sm:$0xff] %vm1333, %v1301
      %1335 = vst.msk [vmem:[%s177 + $0x8] sm:$0xff] %vm1333, %v1302
      %1336 = vst.msk [vmem:[%s177 + $0x10] sm:$0xff] %vm1333, %v1303
      %1337 = vst.msk [vmem:[%s177 + $0x18] sm:$0xff] %vm1333, %v1304
      %1338 = vst.msk [vmem:[%s177 + $0x20] sm:$0xff] %vm1333, %v1305
      %1339 = vst.msk [vmem:[%s177 + $0x28] sm:$0xff] %vm1333, %v1306
      %1340 = vst.msk [vmem:[%s177 + $0x30] sm:$0xff] %vm1333, %v1307
      %1341 = vst.msk [vmem:[%s177 + $0x38] sm:$0xff] %vm1333, %v1308
      %1342 = vst.msk [vmem:[%s177 + $0x40] sm:$0xff] %vm1333, %v1309
      %1343 = vst.msk [vmem:[%s177 + $0x48] sm:$0xff] %vm1333, %v1310
      %1344 = vst.msk [vmem:[%s177 + $0x50] sm:$0xff] %vm1333, %v1311
      %1345 = vst.msk [vmem:[%s177 + $0x58] sm:$0xff] %vm1333, %v1312
      %1346 = vst.msk [vmem:[%s177 + $0x60] sm:$0xff] %vm1333, %v1313
      %1347 = vst.msk [vmem:[%s177 + $0x68] sm:$0xff] %vm1333, %v1314
      %1348 = vst.msk [vmem:[%s177 + $0x70] sm:$0xff] %vm1333, %v1315
      %1349 = vst.msk [vmem:[%s177 + $0x78] sm:$0xff] %vm1333, %v1316
      %1350 = vst.msk [vmem:[%s177 + $0x80] sm:$0xff] %vm1333, %v1317
      %1351 = vst.msk [vmem:[%s177 + $0x88] sm:$0xff] %vm1333, %v1318
      %1352 = vst.msk [vmem:[%s177 + $0x90] sm:$0xff] %vm1333, %v1319
      %1353 = vst.msk [vmem:[%s177 + $0x98] sm:$0xff] %vm1333, %v1320
      %1354 = vst.msk [vmem:[%s177 + $0xa0] sm:$0xff] %vm1333, %v1321
      %1355 = vst.msk [vmem:[%s177 + $0xa8] sm:$0xff] %vm1333, %v1322
      %1356 = vst.msk [vmem:[%s177 + $0xb0] sm:$0xff] %vm1333, %v1323
      %1357 = vst.msk [vmem:[%s177 + $0xb8] sm:$0xff] %vm1333, %v1324
      %1358 = vst.msk [vmem:[%s177 + $0xc0] sm:$0xff] %vm1333, %v1325
      %1359 = vst.msk [vmem:[%s177 + $0xc8] sm:$0xff] %vm1333, %v1326
      %1360 = vst.msk [vmem:[%s177 + $0xd0] sm:$0xff] %vm1333, %v1327
      %1361 = vst.msk [vmem:[%s177 + $0xd8] sm:$0xff] %vm1333, %v1328
      %1362 = vst.msk [vmem:[%s177 + $0xe0] sm:$0xff] %vm1333, %v1329
      %1363 = vst.msk [vmem:[%s177 + $0xe8] sm:$0xff] %vm1333, %v1330
      %1364 = vst.msk [vmem:[%s177 + $0xf0] sm:$0xff] %vm1333, %v1331
      %1365 = vst.msk [vmem:[%s177 + $0xf8] sm:$0xff] %vm1333, %v1332
      %s1366 = smul.u32 2, %s15
      %p1367 = scmp.lt.s32.totalorder %s1366, 3
      %s1368 = scalar_select %p1367, %s1366, 3
      %s1369 = smul.addr %s1368, 16
      %s1370 = smul.addr %s1369, 8
      %s1371 = scalar_lea.vmem %s3, %s1370
      // Predicated region
      $region29: #{tpu_custom_call.1} parent=27 // pred_check
        %p1372 = pneg %p85
      $region30: #{tpu_custom_call.1} parent=27 // pred_check_branch
        %1374 = sbr.rel (%p1372) target = $region32
      $region31: #{tpu_custom_call.1} parent=27 // pred_region
        %s1375 = smul.u32 2, %s15
      $region32: #{tpu_custom_call.1} parent=27 // pred_fallthru
        _
    $region28: #{tpu_custom_call.1} parent=5 // pred_fallthru
      _
    %p1376 = scmp.le.s32.totalorder 2, %s10
    // Predicated region
    $region33: #{tpu_custom_call.1} parent=5 // pred_check
      %p1377 = pneg %p1376
    $region34: #{tpu_custom_call.1} parent=5 // pred_check_branch
      %1379 = sbr.rel (%p1377) target = $region36
    $region35: #{tpu_custom_call.1} parent=5 // pred_region
      %s1380 = ssub.s32 %s10, 2
      // Predicated region
      $region37: #{tpu_custom_call.1} parent=35 // pred_check
        %p1381 = pneg %p91
      $region38: #{tpu_custom_call.1} parent=35 // pred_check_branch
        %1383 = sbr.rel (%p1381) target = $region40
      $region39: #{tpu_custom_call.1} parent=35 // pred_region
        %s1384 = smul.u32 2, %s16
        %p1385 = scmp.lt.s32.totalorder %s1384, 3
        %s1386 = scalar_select %p1385, %s1384, 3
        %s1387 = smul.addr %s1386, 16
        %s1388 = smul.addr %s1387, 8
        %s1389 = scalar_lea.vmem %s3, %s1388
      $region40: #{tpu_custom_call.1} parent=35 // pred_fallthru
        _
    $region36: #{tpu_custom_call.1} parent=5 // pred_fallthru
      _
  $region6: #{tpu_custom_call.1} parent=0 // loop_footer
    %s14 = sadd.s32 1, %s10
  $region7: #{tpu_custom_call.1} parent=0 // loop_footer_branch
    %9 = sbr.rel target = $region3
  $region8: #{tpu_custom_call.1} parent=0 // loop_exit
    _

</llo_original>
